<compile_context>
chip_gen: v5e
topology: v5e:2x2
jax: 0.10.0
libtpu: 0.0.40
codegen_flags: <defaults>
</compile_context>

<pallas_src>
import math
import numpy as np
import jax
import jax.numpy as jnp
from jax import lax
from jax.experimental import pallas as pl
from jax.experimental.pallas import tpu as pltpu


# ------------------------------------------------------------------ helpers
def get_mask(input_size, window_size):
    all_size = [input_size]
    for i in range(len(window_size)):
        all_size.append(math.floor(all_size[i] / window_size[i]))
    return all_size


# ------------------------------------------------------------- Pallas kernel
def _fused_tail_kernel(sh_ref, xn_ref, res_ref, mean_ref, std_ref,
                       wqkv_ref, bqkv_ref, wlin_ref, wout_ref, winter_ref,
                       bheads_ref, wtran_ref, btran_ref, o_ref):
    """Single fused kernel:
       1) Q/K/V projection of the hyperedge sums as ONE (E,C)@(C,3C) dot,
       2) softmax self-attention over the hyperedges,
       3) Linear / out_tran / inter_tran heads accumulated in-vreg,
       4) Linear_Tran and de-normalization, stored directly as (B, pred_len, C).
       Batch is a static unrolled loop of 2D dots (no grid, no per-step cost)."""
    B, _, C = xn_ref.shape
    scale = 1.0 / (C ** 0.5)
    wqkv = wqkv_ref[...]        # (C, 3C)   pre-stacked [Wq^T | Wk^T | Wv^T]
    bqkv = bqkv_ref[...]        # (1, 3C)
    wlin = wlin_ref[...]        # (P, L)
    wout = wout_ref[...]        # (P, Ms)
    winter = winter_ref[...]    # (P, E)    zero-padded columns of inter_tran dropped
    bheads = bheads_ref[...]    # (P, 1)    = b_lin + b_out + b_inter
    wtran = wtran_ref[...]      # (P, P)
    btran = btran_ref[...]      # (P, 1)
    for b in range(B):          # static unroll — no grid-step overhead
        # --- SelfAttentionLayer on the raw hyperedge sums -----------------
        qkv = jnp.dot(sh_ref[b], wqkv, preferred_element_type=jnp.float32) + bqkv  # (E, 3C)
        q = qkv[:, 0:C]
        k = qkv[:, C:2 * C]
        v = qkv[:, 2 * C:3 * C]
        s = lax.dot_general(q, k, (((1,), (1,)), ((), ())),
                            preferred_element_type=jnp.float32) * scale            # (E, E)
        s = s - jnp.max(s, axis=-1, keepdims=True)
        e = jnp.exp(s)
        p = e / jnp.sum(e, axis=-1, keepdims=True)      # exact softmax denominator
        att = jnp.dot(p, v, preferred_element_type=jnp.float32)                    # (E, C)
        # --- output heads + Linear_Tran + de-normalization -----------------
        # Left-multiplying by the untransposed PyTorch weights yields (P, C),
        # i.e. the final (B, pred_len, C) layout, with no transposes at all.
        # (Reference sums the three head outputs BEFORE Linear_Tran, so the
        #  bias sum b_lin+b_out+b_inter is exact.)
        y = (jnp.dot(wlin, xn_ref[b], preferred_element_type=jnp.float32)
             + jnp.dot(wout, res_ref[b], preferred_element_type=jnp.float32)
             + jnp.dot(winter, att, preferred_element_type=jnp.float32)
             + bheads)                                                              # (P, C)
        y = jnp.dot(wtran, y, preferred_element_type=jnp.float32) + btran           # (P, C)
        o_ref[b] = y * std_ref[b] + mean_ref[b]


def pallas_attention_heads(sum_hyper, x_norm, result_tensor, mean_enc, std_enc,
                           W_qkv, b_qkv, W_lin, W_out, W_interE, b_heads,
                           W_tran, b_tran):
    """One pallas_call for the whole attention + heads + de-norm tail."""
    B, _, C = x_norm.shape
    P = W_lin.shape[0]
    vm = pl.BlockSpec(memory_space=pltpu.MemorySpace.VMEM)
    return pl.pallas_call(
        _fused_tail_kernel,
        out_shape=jax.ShapeDtypeStruct((B, P, C), jnp.float32),
        in_specs=[vm] * 13,
        out_specs=vm,
    )(sum_hyper, x_norm, result_tensor, mean_enc, std_enc,
      W_qkv, b_qkv, W_lin, W_out, W_interE, b_heads, W_tran, b_tran)


# -------------------------------------------- host-side hypergraph topology
def build_hypergraphs(embedhy_list, embednod_list, alpha=3.0, k=3):
    """multi_adaptive_hypergraoh.forward — pure integer/topology glue (numpy)."""
    graphs = []
    for hy, nod in zip(embedhy_list, embednod_list):
        hy = np.asarray(hy, np.float64)
        nod = np.asarray(nod, np.float64)
        a = np.maximum(alpha * (nod @ hy.T), 0.0)                 # relu(alpha*a)
        e = np.exp(a - a.max(axis=1, keepdims=True))
        adj = e / e.sum(axis=1, keepdims=True)                    # softmax dim=1
        kk = min(adj.shape[1], k)
        topk_idx = np.argsort(-adj, axis=1)[:, :kk]
        mask = np.zeros_like(adj)
        np.put_along_axis(mask, topk_idx, 1.0, axis=1)
        adj = np.where(adj * mask > 0.5, 1, 0).astype(np.int64)
        adj = adj[:, adj.any(axis=0)]
        if adj.shape[1] == 0:
            # TODO(synk): the reference crashes on an empty hypergraph; fall back
            # to assigning every node to its argmax hyperedge.
            adj = np.zeros(a.shape, np.int64)
            adj[np.arange(a.shape[0]), np.argmax(a, axis=1)] = 1
            adj = adj[:, adj.any(axis=0)]
        node_list, edge_list = [], []
        for col in range(adj.shape[1]):
            rows = np.nonzero(adj[:, col])[0]
            node_list.append(rows)
            edge_list.append(np.full((rows.size,), col, dtype=np.int64))
        graphs.append(np.vstack([np.concatenate(node_list),
                                 np.concatenate(edge_list)]))
    return graphs


def prepare_topology(graphs, all_size):
    """Merge per-scale graphs into one index space + block-diagonal incidence."""
    n_off = np.cumsum([0] + list(all_size))
    e_sizes = [int(g[1].max()) + 1 for g in graphs]
    e_off = np.cumsum([0] + e_sizes)
    node_idx = np.concatenate([g[0] + n_off[i] for i, g in enumerate(graphs)]).astype(np.int32)
    edge_idx = np.concatenate([g[1] + e_off[i] for i, g in enumerate(graphs)]).astype(np.int32)
    N_total = int(n_off[len(graphs)])
    E_total = int(e_off[-1])
    H = np.zeros((N_total, E_total), np.float32)
    H[node_idx, edge_idx] = 1.0
    nnz_sizes = [g.shape[1] for g in graphs]
    nnz_off = np.cumsum([0] + nnz_sizes)
    return dict(
        node_idx=jnp.asarray(node_idx), edge_idx=jnp.asarray(edge_idx),
        Ht=jnp.asarray(H.T), N_total=N_total, E_total=E_total,
        edge_ranges=[(int(e_off[i]), int(e_off[i + 1])) for i in range(len(graphs))],
        nnz_ranges=[(int(nnz_off[i]), int(nnz_off[i + 1])) for i in range(len(graphs))],
    )


# ------------------------------------------------------- merged HypergraphConv
def hypergraph_conv_all(seq_enc, topo, weights, atts, negative_slope=0.2):
    """All three HypergraphConv layers in one merged node/edge index space (jnp)."""
    B, _, C = seq_enc[0].shape
    N_total, E_total = topo['N_total'], topo['E_total']
    node_idx, edge_idx, Ht = topo['node_idx'], topo['edge_idx'], topo['Ht']
    nnz_total = int(node_idx.shape[0])

    # per-scale weight projections (tiny GEMMs; XLA fuses them)
    xw = jnp.concatenate(
        [jnp.einsum('bnc,cd->bnd', seq_enc[i], weights[i]) for i in range(len(seq_enc))],
        axis=1)                                                    # (B, N_total, C)
    x1 = jnp.transpose(xw, (1, 0, 2))                              # (N_total, B, C)
    x_i = x1[node_idx]                                             # (nnz, B, C)

    # TODO(synk): the PyTorch code accumulates edge sums in-place on views of x1
    # (aliasing side effect); we implement the intended segment-sum semantics.
    edge_sums = jnp.dot(Ht, x1.reshape(N_total, B * C)).reshape(E_total, B, C)
    x_j = edge_sums[edge_idx]                                      # (nnz, B, C)

    # per-scale pairwise hyperedge consistency loss
    loss_per_graph = []
    for (e0, e1) in topo['edge_ranges']:
        es = edge_sums[e0:e1]                                      # (E_i, B, C)
        inner = jnp.einsum('kbc,mbc->kmb', es, es)
        nrm = jnp.sqrt(jnp.sum(es * es, axis=-1))                  # (E_i, B)
        alpha_km = inner / (nrm[:, None, :] * nrm[None, :, :] + 1e-12)
        diff = es[:, None, :, :] - es[None, :, :, :]
        dist = jnp.sqrt(jnp.sum(diff * diff, axis=-1))             # (E_i, E_i, B)
        loss_item = alpha_km * dist + (1.0 - alpha_km) * jnp.maximum(4.2 - dist, 0.0)
        lh = jnp.sum(jnp.abs(jnp.mean(loss_item, axis=-1))) / float((e1 - e0 + 1) ** 2)
        loss_per_graph.append(lh)

    # attention coefficients (per-scale att params, merged segment softmax)
    a_parts = []
    for gi, (s0, s1) in enumerate(topo['nnz_ranges']):
        att_flat = atts[gi].reshape(-1)                            # (2C,)
        a_parts.append(jnp.einsum('nbc,c->nb', x_i[s0:s1], att_flat[:C]) +
                       jnp.einsum('nbc,c->nb', x_j[s0:s1], att_flat[C:]))
    a_e = jnp.concatenate(a_parts, axis=0)                         # (nnz, B)
    a_e = jnp.where(a_e >= 0, a_e, negative_slope * a_e)           # leaky_relu
    amax = jax.ops.segment_max(a_e, node_idx, num_segments=N_total)
    a_exp = jnp.exp(a_e - amax[node_idx])
    asum = jax.ops.segment_sum(a_exp, node_idx, num_segments=N_total)
    alpha_e = a_exp / (asum[node_idx] + 1e-16)
    # TODO(synk): F.dropout(p=0.1) skipped (deterministic eval mode).

    ones = jnp.ones((nnz_total,), jnp.float32)
    D = jax.ops.segment_sum(ones, node_idx, num_segments=N_total)
    Bdeg = jax.ops.segment_sum(ones, edge_idx, num_segments=E_total)
    Bnorm = jnp.where(Bdeg > 0, 1.0 / Bdeg, 0.0)

    # two-pass message passing (node -> edge -> node), merged over all scales
    msg1 = Bnorm[edge_idx][:, None, None] * alpha_e[:, :, None] * x1[node_idx]
    out1 = jax.ops.segment_sum(msg1, edge_idx, num_segments=E_total)   # (E_total, B, C)
    msg2 = D[node_idx][:, None, None] * alpha_e[:, :, None] * out1[edge_idx]
    out2 = jax.ops.segment_sum(msg2, node_idx, num_segments=N_total)   # (N_total, B, C)
    out = jnp.transpose(out2, (1, 0, 2))                               # (B, N_total, C)

    con = jnp.float32(0.0)
    for gi, (s0, s1) in enumerate(topo['nnz_ranges']):
        con = con + jnp.abs(jnp.mean(x_i[s0:s1] - x_j[s0:s1])) + loss_per_graph[gi]
    return out, con


# ------------------------------------------------------------ param prep (hoisted)
def prepare_params(params):
    C = params['Wq'].shape[0]
    p = dict(params)
    # QKV weights stacked along the output dim -> one (C, 3C) matmul in-kernel.
    p['W_qkv'] = jnp.concatenate([params['Wq'].T, params['Wk'].T, params['Wv'].T], axis=1)
    p['b_qkv'] = jnp.concatenate([params['bq'], params['bk'], params['bv']]).reshape(1, 3 * C)
    # Reference sums the three head outputs before Linear_Tran, so biases add.
    p['b_heads'] = (params['b_lin'] + params['b_out'] + params['b_inter']).reshape(-1, 1)
    p['b_tran2'] = params['b_tran'].reshape(-1, 1)
    return p


# -------------------------------------------------------------- Model.forward
def model_forward(x, x_mark_enc, params, cfg):
    del x_mark_enc  # unused by the reference forward
    window_size = cfg['window_size']
    topo = cfg['topo']
    Bb, L, C = x.shape
    x = jnp.asarray(x, jnp.float32)

    # normalization in plain jnp (XLA fuses it with the pooling below)
    mean_enc = jnp.mean(x, axis=1, keepdims=True)
    xc = x - mean_enc
    var = jnp.mean(xc * xc, axis=1, keepdims=True)                 # unbiased=False
    std_enc = jnp.sqrt(var + 1e-5)
    x_norm = xc / std_enc

    # TODO(synk): configs.CSCM class is not provided in the reference; use window
    # average pooling so seq_enc[i] has shape (B, all_size[i], enc_in).
    seq_enc = [x_norm]
    cur = x_norm
    for w in window_size:
        Ln = cur.shape[1] // w
        cur = cur[:, :Ln * w, :].reshape(Bb, Ln, w, C).mean(axis=2)
        seq_enc.append(cur)
    seq_all = jnp.concatenate(seq_enc, axis=1)                     # (B, N_total, C)

    # raw per-hyperedge sums for ALL scales via one block-diagonal incidence matmul
    x1_raw = jnp.transpose(seq_all, (1, 0, 2)).reshape(topo['N_total'], Bb * C)
    sums = jnp.dot(topo['Ht'], x1_raw).reshape(topo['E_total'], Bb, C)
    sum_hyper = jnp.transpose(sums, (1, 0, 2))                     # (B, E_total, C)

    # merged hypergraph convolution across all scales (jnp segment ops)
    result_tensor, result_conloss = hypergraph_conv_all(
        seq_enc, topo, params['hyconv_weight'], params['hyconv_att'])

    # padding rows of `pad` are zero, so the inter_tran matmul only touches the
    # first E_total columns of its weight.
    E_total = topo['E_total']
    assert 80 - E_total >= 0, "total hyperedge count exceeds inter_tran width (80)"
    W_interE = params['W_inter'][:, :E_total]                      # (P, E_total)

    # ONE fused Pallas kernel: QKV+attention, heads, Linear_Tran, de-normalize.
    out = pallas_attention_heads(
        sum_hyper, x_norm, result_tensor, mean_enc, std_enc,
        params['W_qkv'], params['b_qkv'], params['W_lin'], params['W_out'],
        W_interE, params['b_heads'], params['W_tran'], params['b_tran2'])
    return out, result_conloss


# --------------------------------------------------------------------- main
if __name__ == "__main__":
    cfg = dict(seq_len=16, pred_len=8, enc_in=4, d_model=16,
               window_size=[2, 2], hyper_num=[6, 4, 3], k=3)
    B = 2
    C, L, P, D = cfg['enc_in'], cfg['seq_len'], cfg['pred_len'], cfg['d_model']

    all_size = get_mask(L, cfg['window_size'])        # [16, 8, 4]
    Ms_length = sum(all_size)                         # 28

    key = jax.random.PRNGKey(0)
    keys = jax.random.split(key, 32)

    def rnd(k_, shape, scale=0.1):
        return (scale * jax.random.normal(k_, shape)).astype(jnp.float32)

    params = dict(
        W_lin=rnd(keys[0], (P, L)), b_lin=rnd(keys[1], (P,)),
        W_tran=rnd(keys[2], (P, P)), b_tran=rnd(keys[3], (P,)),
        # out_tran weight is fixed to 1/Ms_length * ones in the reference __init__
        W_out=jnp.full((P, Ms_length), 1.0 / Ms_length, jnp.float32),
        b_out=rnd(keys[4], (P,)),
        W_inter=rnd(keys[5], (P, 80)), b_inter=rnd(keys[6], (P,)),
        Wq=rnd(keys[7], (C, C)), bq=rnd(keys[8], (C,)),
        Wk=rnd(keys[9], (C, C)), bk=rnd(keys[10], (C,)),
        Wv=rnd(keys[11], (C, C)), bv=rnd(keys[12], (C,)),
        hyconv_weight=[rnd(keys[13 + i], (C, C), 0.5) for i in range(3)],
        hyconv_att=[rnd(keys[16 + i], (1, 1, 2 * C), 0.5) for i in range(3)],
    )
    params = prepare_params(params)                   # hoist casts/stacking/bias sums

    # multi_adaptive_hypergraoh embeddings (deterministic) -> host hypergraphs.
    embedhy = [np.asarray(jax.random.normal(keys[20 + i], (cfg['hyper_num'][i], D)))
               for i in range(3)]
    embednod = [np.asarray(jax.random.normal(keys[24 + i], (all_size[i], D)))
                for i in range(3)]
    graphs = build_hypergraphs(embedhy, embednod, alpha=3.0, k=cfg['k'])
    cfg['topo'] = prepare_topology(graphs, all_size)

    x = jax.random.normal(keys[28], (B, L, C), jnp.float32)
    x_mark_enc = jax.random.normal(keys[29], (B, L, C), jnp.float32)

    fwd = jax.jit(lambda xi, xm, pp: model_forward(xi, xm, pp, cfg))
    out, conloss = fwd(x, x_mark_enc, params)
    out = jax.block_until_ready(out)
    conloss = jax.block_until_ready(conloss)
    assert out.shape == (B, P, C)
    assert bool(jnp.isfinite(out).all())
    assert bool(jnp.isfinite(conloss))
    print("KERNEL_OK")
</pallas_src>

<mosaic_0001>
module attributes {stable_mosaic.version = 11 : i64} {
  func.func @_fused_tail_kernel(%arg0: memref<2x11x4xf32, #tpu.memory_space<vmem>>, %arg1: memref<2x16x4xf32, #tpu.memory_space<vmem>>, %arg2: memref<2x28x4xf32, #tpu.memory_space<vmem>>, %arg3: memref<2x1x4xf32, #tpu.memory_space<vmem>>, %arg4: memref<2x1x4xf32, #tpu.memory_space<vmem>>, %arg5: memref<4x12xf32, #tpu.memory_space<vmem>>, %arg6: memref<1x12xf32, #tpu.memory_space<vmem>>, %arg7: memref<8x16xf32, #tpu.memory_space<vmem>>, %arg8: memref<8x28xf32, #tpu.memory_space<vmem>>, %arg9: memref<8x11xf32, #tpu.memory_space<vmem>>, %arg10: memref<8x1xf32, #tpu.memory_space<vmem>>, %arg11: memref<8x8xf32, #tpu.memory_space<vmem>>, %arg12: memref<8x1xf32, #tpu.memory_space<vmem>>, %arg13: memref<2x8x4xf32, #tpu.memory_space<vmem>>) attributes {dimension_semantics = [], scalar_prefetch = 0 : i64, scratch_operands = 0 : i64, tpu.core_type = #tpu.core_type<tc>} {
    %c0 = arith.constant 0 : index
    %c0_0 = arith.constant 0 : index
    %0 = vector.load %arg5[%c0, %c0_0] : memref<4x12xf32, #tpu.memory_space<vmem>>, vector<4x12xf32>
    %c0_1 = arith.constant 0 : index
    %c0_2 = arith.constant 0 : index
    %1 = vector.load %arg6[%c0_1, %c0_2] : memref<1x12xf32, #tpu.memory_space<vmem>>, vector<1x12xf32>
    %c0_3 = arith.constant 0 : index
    %c0_4 = arith.constant 0 : index
    %2 = vector.load %arg7[%c0_3, %c0_4] : memref<8x16xf32, #tpu.memory_space<vmem>>, vector<8x16xf32>
    %c0_5 = arith.constant 0 : index
    %c0_6 = arith.constant 0 : index
    %3 = vector.load %arg8[%c0_5, %c0_6] : memref<8x28xf32, #tpu.memory_space<vmem>>, vector<8x28xf32>
    %c0_7 = arith.constant 0 : index
    %c0_8 = arith.constant 0 : index
    %4 = vector.load %arg9[%c0_7, %c0_8] : memref<8x11xf32, #tpu.memory_space<vmem>>, vector<8x11xf32>
    %c0_9 = arith.constant 0 : index
    %c0_10 = arith.constant 0 : index
    %5 = vector.load %arg10[%c0_9, %c0_10] : memref<8x1xf32, #tpu.memory_space<vmem>>, vector<8x1xf32>
    %c0_11 = arith.constant 0 : index
    %c0_12 = arith.constant 0 : index
    %6 = vector.load %arg11[%c0_11, %c0_12] : memref<8x8xf32, #tpu.memory_space<vmem>>, vector<8x8xf32>
    %c0_13 = arith.constant 0 : index
    %c0_14 = arith.constant 0 : index
    %7 = vector.load %arg12[%c0_13, %c0_14] : memref<8x1xf32, #tpu.memory_space<vmem>>, vector<8x1xf32>
    %c0_15 = arith.constant 0 : index
    %c0_16 = arith.constant 0 : index
    %c0_17 = arith.constant 0 : index
    %8 = vector.load %arg0[%c0_15, %c0_16, %c0_17] : memref<2x11x4xf32, #tpu.memory_space<vmem>>, vector<1x11x4xf32>
    %9 = vector.shape_cast %8 : vector<1x11x4xf32> to vector<11x4xf32>
    %cst = arith.constant dense<0.000000e+00> : vector<11x12xf32>
    %10 = tpu.matmul %9, %0, %cst {dimension_numbers = #tpu.dot_dimension_numbers<[1], [0], [0], [1], [0, 0, 1, 1], [], []>} : vector<11x4xf32>, vector<4x12xf32>, vector<11x12xf32> -> vector<11x12xf32>
    %11 = vector.broadcast %1 : vector<1x12xf32> to vector<11x12xf32>
    %12 = arith.addf %10, %11 : vector<11x12xf32>
    %13 = vector.extract_strided_slice %12 {offsets = [0, 0], sizes = [11, 4], strides = [1, 1]} : vector<11x12xf32> to vector<11x4xf32>
    %14 = vector.extract_strided_slice %12 {offsets = [0, 4], sizes = [11, 4], strides = [1, 1]} : vector<11x12xf32> to vector<11x4xf32>
    %15 = vector.extract_strided_slice %12 {offsets = [0, 8], sizes = [11, 4], strides = [1, 1]} : vector<11x12xf32> to vector<11x4xf32>
    %cst_18 = arith.constant dense<0.000000e+00> : vector<11x11xf32>
    %16 = tpu.matmul %13, %14, %cst_18 {dimension_numbers = #tpu.dot_dimension_numbers<[1], [1], [0], [0], [0, 0, 1, 0], [], []>} : vector<11x4xf32>, vector<11x4xf32>, vector<11x11xf32> -> vector<11x11xf32>
    %cst_19 = arith.constant 5.000000e-01 : f32
    %17 = vector.broadcast %cst_19 : f32 to vector<11x11xf32>
    %18 = arith.mulf %16, %17 : vector<11x11xf32>
    %cst_20 = arith.constant dense<0xFF800000> : vector<11xf32>
    %19 = vector.multi_reduction <maximumf>, %18, %cst_20 [1] : vector<11x11xf32> to vector<11xf32>
    %20 = vector.shape_cast %19 : vector<11xf32> to vector<11x1xf32>
    %21 = vector.broadcast %20 : vector<11x1xf32> to vector<11x11xf32>
    %22 = arith.subf %18, %21 : vector<11x11xf32>
    %23 = math.exp %22 : vector<11x11xf32>
    %cst_21 = arith.constant dense<0.000000e+00> : vector<11xf32>
    %24 = vector.multi_reduction <add>, %23, %cst_21 [1] : vector<11x11xf32> to vector<11xf32>
    %25 = vector.shape_cast %24 : vector<11xf32> to vector<11x1xf32>
    %26 = vector.broadcast %25 : vector<11x1xf32> to vector<11x11xf32>
    %27 = arith.divf %23, %26 : vector<11x11xf32>
    %cst_22 = arith.constant dense<0.000000e+00> : vector<11x4xf32>
    %28 = tpu.matmul %27, %15, %cst_22 {dimension_numbers = #tpu.dot_dimension_numbers<[1], [0], [0], [1], [0, 0, 1, 1], [], []>} : vector<11x11xf32>, vector<11x4xf32>, vector<11x4xf32> -> vector<11x4xf32>
    %c0_23 = arith.constant 0 : index
    %c0_24 = arith.constant 0 : index
    %c0_25 = arith.constant 0 : index
    %29 = vector.load %arg1[%c0_23, %c0_24, %c0_25] : memref<2x16x4xf32, #tpu.memory_space<vmem>>, vector<1x16x4xf32>
    %30 = vector.shape_cast %29 : vector<1x16x4xf32> to vector<16x4xf32>
    %cst_26 = arith.constant dense<0.000000e+00> : vector<8x4xf32>
    %31 = tpu.matmul %2, %30, %cst_26 {dimension_numbers = #tpu.dot_dimension_numbers<[1], [0], [0], [1], [0, 0, 1, 1], [], []>} : vector<8x16xf32>, vector<16x4xf32>, vector<8x4xf32> -> vector<8x4xf32>
    %c0_27 = arith.constant 0 : index
    %c0_28 = arith.constant 0 : index
    %c0_29 = arith.constant 0 : index
    %32 = vector.load %arg2[%c0_27, %c0_28, %c0_29] : memref<2x28x4xf32, #tpu.memory_space<vmem>>, vector<1x28x4xf32>
    %33 = vector.shape_cast %32 : vector<1x28x4xf32> to vector<28x4xf32>
    %cst_30 = arith.constant dense<0.000000e+00> : vector<8x4xf32>
    %34 = tpu.matmul %3, %33, %cst_30 {dimension_numbers = #tpu.dot_dimension_numbers<[1], [0], [0], [1], [0, 0, 1, 1], [], []>} : vector<8x28xf32>, vector<28x4xf32>, vector<8x4xf32> -> vector<8x4xf32>
    %35 = arith.addf %31, %34 : vector<8x4xf32>
    %cst_31 = arith.constant dense<0.000000e+00> : vector<8x4xf32>
    %36 = tpu.matmul %4, %28, %cst_31 {dimension_numbers = #tpu.dot_dimension_numbers<[1], [0], [0], [1], [0, 0, 1, 1], [], []>} : vector<8x11xf32>, vector<11x4xf32>, vector<8x4xf32> -> vector<8x4xf32>
    %37 = arith.addf %35, %36 : vector<8x4xf32>
    %38 = vector.broadcast %5 : vector<8x1xf32> to vector<8x4xf32>
    %39 = arith.addf %37, %38 : vector<8x4xf32>
    %cst_32 = arith.constant dense<0.000000e+00> : vector<8x4xf32>
    %40 = tpu.matmul %6, %39, %cst_32 {dimension_numbers = #tpu.dot_dimension_numbers<[1], [0], [0], [1], [0, 0, 1, 1], [], []>} : vector<8x8xf32>, vector<8x4xf32>, vector<8x4xf32> -> vector<8x4xf32>
    %41 = vector.broadcast %7 : vector<8x1xf32> to vector<8x4xf32>
    %42 = arith.addf %40, %41 : vector<8x4xf32>
    %c0_33 = arith.constant 0 : index
    %c0_34 = arith.constant 0 : index
    %c0_35 = arith.constant 0 : index
    %43 = vector.load %arg4[%c0_33, %c0_34, %c0_35] : memref<2x1x4xf32, #tpu.memory_space<vmem>>, vector<1x1x4xf32>
    %44 = vector.shape_cast %43 : vector<1x1x4xf32> to vector<1x4xf32>
    %45 = vector.broadcast %44 : vector<1x4xf32> to vector<8x4xf32>
    %46 = arith.mulf %42, %45 : vector<8x4xf32>
    %c0_36 = arith.constant 0 : index
    %c0_37 = arith.constant 0 : index
    %c0_38 = arith.constant 0 : index
    %47 = vector.load %arg3[%c0_36, %c0_37, %c0_38] : memref<2x1x4xf32, #tpu.memory_space<vmem>>, vector<1x1x4xf32>
    %48 = vector.shape_cast %47 : vector<1x1x4xf32> to vector<1x4xf32>
    %49 = vector.broadcast %48 : vector<1x4xf32> to vector<8x4xf32>
    %50 = arith.addf %46, %49 : vector<8x4xf32>
    %c0_39 = arith.constant 0 : index
    %c0_40 = arith.constant 0 : index
    %c0_41 = arith.constant 0 : index
    %51 = vector.load %arg13[%c0_39, %c0_40, %c0_41] : memref<2x8x4xf32, #tpu.memory_space<vmem>>, vector<1x8x4xf32>
    %52 = vector.shape_cast %51 : vector<1x8x4xf32> to vector<8x4xf32>
    %53 = vector.shape_cast %50 : vector<8x4xf32> to vector<1x8x4xf32>
    tpu.vector_store %arg13[%c0_39, %c0_40, %c0_41], %53 {strides = array<i32>} : memref<2x8x4xf32, #tpu.memory_space<vmem>>, vector<1x8x4xf32>,
    %c1 = arith.constant 1 : index
    %c0_42 = arith.constant 0 : index
    %c0_43 = arith.constant 0 : index
    %54 = vector.load %arg0[%c1, %c0_42, %c0_43] : memref<2x11x4xf32, #tpu.memory_space<vmem>>, vector<1x11x4xf32>
    %55 = vector.shape_cast %54 : vector<1x11x4xf32> to vector<11x4xf32>
    %cst_44 = arith.constant dense<0.000000e+00> : vector<11x12xf32>
    %56 = tpu.matmul %55, %0, %cst_44 {dimension_numbers = #tpu.dot_dimension_numbers<[1], [0], [0], [1], [0, 0, 1, 1], [], []>} : vector<11x4xf32>, vector<4x12xf32>, vector<11x12xf32> -> vector<11x12xf32>
    %57 = vector.broadcast %1 : vector<1x12xf32> to vector<11x12xf32>
    %58 = arith.addf %56, %57 : vector<11x12xf32>
    %59 = vector.extract_strided_slice %58 {offsets = [0, 0], sizes = [11, 4], strides = [1, 1]} : vector<11x12xf32> to vector<11x4xf32>
    %60 = vector.extract_strided_slice %58 {offsets = [0, 4], sizes = [11, 4], strides = [1, 1]} : vector<11x12xf32> to vector<11x4xf32>
    %61 = vector.extract_strided_slice %58 {offsets = [0, 8], sizes = [11, 4], strides = [1, 1]} : vector<11x12xf32> to vector<11x4xf32>
    %cst_45 = arith.constant dense<0.000000e+00> : vector<11x11xf32>
    %62 = tpu.matmul %59, %60, %cst_45 {dimension_numbers = #tpu.dot_dimension_numbers<[1], [1], [0], [0], [0, 0, 1, 0], [], []>} : vector<11x4xf32>, vector<11x4xf32>, vector<11x11xf32> -> vector<11x11xf32>
    %cst_46 = arith.constant 5.000000e-01 : f32
    %63 = vector.broadcast %cst_46 : f32 to vector<11x11xf32>
    %64 = arith.mulf %62, %63 : vector<11x11xf32>
    %cst_47 = arith.constant dense<0xFF800000> : vector<11xf32>
    %65 = vector.multi_reduction <maximumf>, %64, %cst_47 [1] : vector<11x11xf32> to vector<11xf32>
    %66 = vector.shape_cast %65 : vector<11xf32> to vector<11x1xf32>
    %67 = vector.broadcast %66 : vector<11x1xf32> to vector<11x11xf32>
    %68 = arith.subf %64, %67 : vector<11x11xf32>
    %69 = math.exp %68 : vector<11x11xf32>
    %cst_48 = arith.constant dense<0.000000e+00> : vector<11xf32>
    %70 = vector.multi_reduction <add>, %69, %cst_48 [1] : vector<11x11xf32> to vector<11xf32>
    %71 = vector.shape_cast %70 : vector<11xf32> to vector<11x1xf32>
    %72 = vector.broadcast %71 : vector<11x1xf32> to vector<11x11xf32>
    %73 = arith.divf %69, %72 : vector<11x11xf32>
    %cst_49 = arith.constant dense<0.000000e+00> : vector<11x4xf32>
    %74 = tpu.matmul %73, %61, %cst_49 {dimension_numbers = #tpu.dot_dimension_numbers<[1], [0], [0], [1], [0, 0, 1, 1], [], []>} : vector<11x11xf32>, vector<11x4xf32>, vector<11x4xf32> -> vector<11x4xf32>
    %c1_50 = arith.constant 1 : index
    %c0_51 = arith.constant 0 : index
    %c0_52 = arith.constant 0 : index
    %75 = vector.load %arg1[%c1_50, %c0_51, %c0_52] : memref<2x16x4xf32, #tpu.memory_space<vmem>>, vector<1x16x4xf32>
    %76 = vector.shape_cast %75 : vector<1x16x4xf32> to vector<16x4xf32>
    %cst_53 = arith.constant dense<0.000000e+00> : vector<8x4xf32>
    %77 = tpu.matmul %2, %76, %cst_53 {dimension_numbers = #tpu.dot_dimension_numbers<[1], [0], [0], [1], [0, 0, 1, 1], [], []>} : vector<8x16xf32>, vector<16x4xf32>, vector<8x4xf32> -> vector<8x4xf32>
    %c1_54 = arith.constant 1 : index
    %c0_55 = arith.constant 0 : index
    %c0_56 = arith.constant 0 : index
    %78 = vector.load %arg2[%c1_54, %c0_55, %c0_56] : memref<2x28x4xf32, #tpu.memory_space<vmem>>, vector<1x28x4xf32>
    %79 = vector.shape_cast %78 : vector<1x28x4xf32> to vector<28x4xf32>
    %cst_57 = arith.constant dense<0.000000e+00> : vector<8x4xf32>
    %80 = tpu.matmul %3, %79, %cst_57 {dimension_numbers = #tpu.dot_dimension_numbers<[1], [0], [0], [1], [0, 0, 1, 1], [], []>} : vector<8x28xf32>, vector<28x4xf32>, vector<8x4xf32> -> vector<8x4xf32>
    %81 = arith.addf %77, %80 : vector<8x4xf32>
    %cst_58 = arith.constant dense<0.000000e+00> : vector<8x4xf32>
    %82 = tpu.matmul %4, %74, %cst_58 {dimension_numbers = #tpu.dot_dimension_numbers<[1], [0], [0], [1], [0, 0, 1, 1], [], []>} : vector<8x11xf32>, vector<11x4xf32>, vector<8x4xf32> -> vector<8x4xf32>
    %83 = arith.addf %81, %82 : vector<8x4xf32>
    %84 = vector.broadcast %5 : vector<8x1xf32> to vector<8x4xf32>
    %85 = arith.addf %83, %84 : vector<8x4xf32>
    %cst_59 = arith.constant dense<0.000000e+00> : vector<8x4xf32>
    %86 = tpu.matmul %6, %85, %cst_59 {dimension_numbers = #tpu.dot_dimension_numbers<[1], [0], [0], [1], [0, 0, 1, 1], [], []>} : vector<8x8xf32>, vector<8x4xf32>, vector<8x4xf32> -> vector<8x4xf32>
    %87 = vector.broadcast %7 : vector<8x1xf32> to vector<8x4xf32>
    %88 = arith.addf %86, %87 : vector<8x4xf32>
    %c1_60 = arith.constant 1 : index
    %c0_61 = arith.constant 0 : index
    %c0_62 = arith.constant 0 : index
    %89 = vector.load %arg4[%c1_60, %c0_61, %c0_62] : memref<2x1x4xf32, #tpu.memory_space<vmem>>, vector<1x1x4xf32>
    %90 = vector.shape_cast %89 : vector<1x1x4xf32> to vector<1x4xf32>
    %91 = vector.broadcast %90 : vector<1x4xf32> to vector<8x4xf32>
    %92 = arith.mulf %88, %91 : vector<8x4xf32>
    %c1_63 = arith.constant 1 : index
    %c0_64 = arith.constant 0 : index
    %c0_65 = arith.constant 0 : index
    %93 = vector.load %arg3[%c1_63, %c0_64, %c0_65] : memref<2x1x4xf32, #tpu.memory_space<vmem>>, vector<1x1x4xf32>
    %94 = vector.shape_cast %93 : vector<1x1x4xf32> to vector<1x4xf32>
    %95 = vector.broadcast %94 : vector<1x4xf32> to vector<8x4xf32>
    %96 = arith.addf %92, %95 : vector<8x4xf32>
    %c1_66 = arith.constant 1 : index
    %c0_67 = arith.constant 0 : index
    %c0_68 = arith.constant 0 : index
    %97 = vector.load %arg13[%c1_66, %c0_67, %c0_68] : memref<2x8x4xf32, #tpu.memory_space<vmem>>, vector<1x8x4xf32>
    %98 = vector.shape_cast %97 : vector<1x8x4xf32> to vector<8x4xf32>
    %99 = vector.shape_cast %96 : vector<8x4xf32> to vector<1x8x4xf32>
    tpu.vector_store %arg13[%c1_66, %c0_67, %c0_68], %99 {strides = array<i32>} : memref<2x8x4xf32, #tpu.memory_space<vmem>>, vector<1x8x4xf32>,
    return
  }
}

</mosaic_0001>

<llo_original>
// kernel: _lambda_.1
$region0: #{_lambda_.1}
  #allocation0 [shape = 'u32[]', space=smem, size = 0x4, offset = 0x4, fixed_abs, tag = 'smem constant byte address 0x4 - core index']
  #allocation1 [shape = 'u32[72,128]{1,0:T(1,128)}', space=vmem, size = 0x9000, scoped, tag = 'internal scratch']
  %s0 = inlined_call_operand.vmem [shape: f32[2,11,4], index: 0, kind: input, shape index: {}]
  %s1 = inlined_call_operand.vmem [shape: f32[2,16,4], index: 1, kind: input, shape index: {}]
  %s2 = inlined_call_operand.vmem [shape: f32[2,28,4], index: 2, kind: input, shape index: {}]
  %s3 = inlined_call_operand.vmem [shape: f32[2,1,4], index: 3, kind: input, shape index: {}]
  %s4 = inlined_call_operand.vmem [shape: f32[2,1,4], index: 4, kind: input, shape index: {}]
  %s5 = inlined_call_operand.vmem [shape: f32[4,12], index: 5, kind: input, shape index: {}]
  %s6 = inlined_call_operand.vmem [shape: f32[1,12], index: 6, kind: input, shape index: {}]
  %s7 = inlined_call_operand.vmem [shape: f32[8,16], index: 7, kind: input, shape index: {}]
  %s8 = inlined_call_operand.vmem [shape: f32[8,28], index: 8, kind: input, shape index: {}]
  %s9 = inlined_call_operand.vmem [shape: f32[8,11], index: 9, kind: input, shape index: {}]
  %s10 = inlined_call_operand.vmem [shape: f32[8,1], index: 10, kind: input, shape index: {}]
  %s11 = inlined_call_operand.vmem [shape: f32[8,8], index: 11, kind: input, shape index: {}]
  %s12 = inlined_call_operand.vmem [shape: f32[8,1], index: 12, kind: input, shape index: {}]
  %s13 = inlined_call_operand.vmem [shape: f32[2,8,4], index: 13, kind: output, shape index: {}]
  %s14 = sld [smem:[#allocation0]]
  $region62: #{_lambda_.1} parent=0
    _
  %s16 = ssub.s32 1, %s14
  %s17 = scalar_select 0, %s16, %s14
  // Predicated region
  $region2: #{_lambda_.1} parent=0 // pred_check
    _
  $region3: #{_lambda_.1} parent=0 // pred_check_branch
    %19 = sbr.rel (0) target = $region5
  $region4: #{_lambda_.1} parent=0 // pred_region
    _
  $region5: #{_lambda_.1} parent=0 // pred_fallthru
    _
  // Predicated region
  $region6: #{_lambda_.1} parent=0 // pred_check
    _
  $region7: #{_lambda_.1} parent=0 // pred_check_branch
    %21 = sbr.rel (0) target = $region9
  $region8: #{_lambda_.1} parent=0 // pred_region
    _
  $region9: #{_lambda_.1} parent=0 // pred_fallthru
    _
  // Predicated region
  $region10: #{_lambda_.1} parent=0 // pred_check
    _
  $region11: #{_lambda_.1} parent=0 // pred_check_branch
    %23 = sbr.rel (0) target = $region13
  $region12: #{_lambda_.1} parent=0 // pred_region
    _
  $region13: #{_lambda_.1} parent=0 // pred_fallthru
    _
  // Predicated region
  $region14: #{_lambda_.1} parent=0 // pred_check
    _
  $region15: #{_lambda_.1} parent=0 // pred_check_branch
    %25 = sbr.rel (0) target = $region17
  $region16: #{_lambda_.1} parent=0 // pred_region
    _
  $region17: #{_lambda_.1} parent=0 // pred_fallthru
    _
  // Predicated region
  $region18: #{_lambda_.1} parent=0 // pred_check
    _
  $region19: #{_lambda_.1} parent=0 // pred_check_branch
    %27 = sbr.rel (0) target = $region21
  $region20: #{_lambda_.1} parent=0 // pred_region
    _
  $region21: #{_lambda_.1} parent=0 // pred_fallthru
    _
  // Predicated region
  $region22: #{_lambda_.1} parent=0 // pred_check
    _
  $region23: #{_lambda_.1} parent=0 // pred_check_branch
    %29 = sbr.rel (0) target = $region25
  $region24: #{_lambda_.1} parent=0 // pred_region
    _
  $region25: #{_lambda_.1} parent=0 // pred_fallthru
    _
  // Predicated region
  $region26: #{_lambda_.1} parent=0 // pred_check
    _
  $region27: #{_lambda_.1} parent=0 // pred_check_branch
    %31 = sbr.rel (0) target = $region29
  $region28: #{_lambda_.1} parent=0 // pred_region
    _
  $region29: #{_lambda_.1} parent=0 // pred_fallthru
    _
  // Predicated region
  $region30: #{_lambda_.1} parent=0 // pred_check
    _
  $region31: #{_lambda_.1} parent=0 // pred_check_branch
    %33 = sbr.rel (0) target = $region33
  $region32: #{_lambda_.1} parent=0 // pred_region
    _
  $region33: #{_lambda_.1} parent=0 // pred_fallthru
    _
  // Predicated region
  $region34: #{_lambda_.1} parent=0 // pred_check
    _
  $region35: #{_lambda_.1} parent=0 // pred_check_branch
    %35 = sbr.rel (0) target = $region37
  $region36: #{_lambda_.1} parent=0 // pred_region
    _
  $region37: #{_lambda_.1} parent=0 // pred_fallthru
    _
  // Predicated region
  $region38: #{_lambda_.1} parent=0 // pred_check
    _
  $region39: #{_lambda_.1} parent=0 // pred_check_branch
    %37 = sbr.rel (0) target = $region41
  $region40: #{_lambda_.1} parent=0 // pred_region
    _
  $region41: #{_lambda_.1} parent=0 // pred_fallthru
    _
  // Predicated region
  $region42: #{_lambda_.1} parent=0 // pred_check
    _
  $region43: #{_lambda_.1} parent=0 // pred_check_branch
    %39 = sbr.rel (0) target = $region45
  $region44: #{_lambda_.1} parent=0 // pred_region
    _
  $region45: #{_lambda_.1} parent=0 // pred_fallthru
    _
  // Predicated region
  $region46: #{_lambda_.1} parent=0 // pred_check
    _
  $region47: #{_lambda_.1} parent=0 // pred_check_branch
    %41 = sbr.rel (0) target = $region49
  $region48: #{_lambda_.1} parent=0 // pred_region
    _
  $region49: #{_lambda_.1} parent=0 // pred_fallthru
    _
  // Predicated region
  $region50: #{_lambda_.1} parent=0 // pred_check
    _
  $region51: #{_lambda_.1} parent=0 // pred_check_branch
    %43 = sbr.rel (0) target = $region53
  $region52: #{_lambda_.1} parent=0 // pred_region
    _
  $region53: #{_lambda_.1} parent=0 // pred_fallthru
    _
  %v44 = vld [vmem:[%s5] sm:$0xf]
  %v45 = vld [vmem:[%s6] sm:$0x1]
  %v46 = vld [vmem:[%s7] sm:$0xff]
  %v47 = vld [vmem:[%s8] sm:$0xff]
  %v48 = vld [vmem:[%s9] sm:$0xff]
  %v49 = vld [vmem:[%s10] sm:$0xff]
  %v50 = vld [vmem:[%s11] sm:$0xff]
  %v51 = vld [vmem:[%s12] sm:$0xff]
  %v52 = vld [vmem:[%s0] sm:$0xff]
  %v53 = vld [vmem:[%s0 + $0x8] sm:$0x7]
  %v55 = vperm.slane %v45, 0
  %vm57 = vcmask 31744
  %v59 = vsel %vm57, %v52, 0
  %v62 = vsel %vm57, %v53, 0
  %vm64 = vcmask 1043456
  %v66 = vsel %vm64, %v44, 0
  %68 = vmatpush.msra.mxu0 0.0
  %69 = vmatpush.msra.mxu0 0.0
  %70 = vmatpush.msra.mxu0 0.0
  %71 = vmatpush.msra.mxu0 0.0
  %72 = vmatpush.msra.mxu0 0.0
  %73 = vmatpush.msra.mxu0 0.0
  %74 = vmatpush.msra.mxu0 0.0
  %75 = vmatpush.msra.mxu0 0.0
  %76 = vmatpush.msra.mxu0 0.0
  %77 = vmatpush.msra.mxu0 0.0
  %78 = vmatpush.msra.mxu0 0.0
  %79 = vmatpush.msra.mxu0 0.0
  %80 = vmatpush.msra.mxu0 0.0
  %81 = vmatpush.msra.mxu0 0.0
  %82 = vmatpush.msra.mxu0 0.0
  %83 = vmatpush.msra.mxu0 %v66
  %84 = vmatmul.f32.gmra.mxu0 %v59
  %v85 = vpop.f32.mrf.mxu0
  %v86 = vadd.f32 %v55, %v85
  %87 = vmatmul.f32.gmra.mxu0 %v62
  %v88 = vpop.f32.mrf.mxu0
  %v89 = vadd.f32 %v55, %v88
  %90 = vdwg.mxu0
  %93 = vrot.lane.b32.xlu0 %v86, 124
  %v94 = vpop.permute.xlu0 %93
  %95 = vrot.lane.b32.xlu0 %v89, 124
  %v96 = vpop.permute.xlu0 %95
  %v97 = vsel %vm57, %v86, 0
  %v99 = vsel %vm57, %v89, 0
  %v101 = vsel %vm57, %v94, 0
  %v103 = vsel %vm57, %v96, 0
  %105 = vmatpush.xpose.msra.mxu0 0.0
  %106 = vmatpush.xpose.msra.mxu0 0.0
  %107 = vmatpush.xpose.msra.mxu0 0.0
  %108 = vmatpush.xpose.msra.mxu0 0.0
  %109 = vmatpush.xpose.msra.mxu0 0.0
  %110 = vmatpush.xpose.msra.mxu0 0.0
  %111 = vmatpush.xpose.msra.mxu0 0.0
  %112 = vmatpush.xpose.msra.mxu0 0.0
  %113 = vmatpush.xpose.msra.mxu0 0.0
  %114 = vmatpush.xpose.msra.mxu0 0.0
  %115 = vmatpush.xpose.msra.mxu0 0.0
  %116 = vmatpush.xpose.msra.mxu0 0.0
  %117 = vmatpush.xpose.msra.mxu0 0.0
  %118 = vmatpush.xpose.msra.mxu0 0.0
  %119 = vmatpush.xpose.msra.mxu0 %v103
  %120 = vmatpush.xpose.msra.mxu0 %v101
  %121 = vmatmul.f32.gmra.mxu0 %v97
  %v122 = vpop.f32.mrf.mxu0
  %v123 = vadd.f32 0.0, %v122
  %124 = vmatmul.f32.gmra.mxu0 %v99
  %v125 = vpop.f32.mrf.mxu0
  %v126 = vadd.f32 0.0, %v125
  %127 = vdwg.mxu0
  %v128 = vmul.f32 %v123, 0.5
  %v129 = vmul.f32 %v126, 0.5
  %vm130 = vcmask 89088
  %v131 = vsel %vm130, %v128, -inf
  %132 = vmax.xlane.f32.xlu0 %v131
  %v133 = vpop.xlane.xlu0 %132
  %vm134 = vcmask 83968
  %v135 = vsel %vm134, %v129, -inf
  %136 = vmax.xlane.f32.xlu0 %v135
  %v137 = vpop.xlane.xlu0 %136
  %v138 = vsub.f32 %v128, %v133
  %v139 = vsub.f32 %v129, %v137
  %v140 = vmul.f32 %v138, 1.442695
  %v141 = vpow.pop %v140
  %v142 = vmul.f32 %v139, 1.442695
  %v143 = vpow.pop %v142
  %v144 = vsel %vm130, %v141, 0.0
  %145 = vadd.xlane.f32.xlu0 %v144
  %v146 = vpop.xlane.xlu0 %145
  %v147 = vsel %vm134, %v143, 0.0
  %148 = vadd.xlane.f32.xlu0 %v147
  %v149 = vpop.xlane.xlu0 %148
  %v150 = vrcp.pop %v146
  %v151 = vmul.f32 %v146, %v150
  %v152 = vsub.f32 1.0, %v151
  %v153 = vmul.f32 %v150, %v152
  %v154 = vadd.f32 %v150, %v153
  %vm155 = vweird.f32 %v146
  %vm156 = vweird.f32 %v150
  %vm157 = vmor %vm155, %vm156
  %v158 = vsel %vm157, %v150, %v154
  %v159 = vand.u32 2147483647, %v146
  %vm160 = vcmp.eq.f32.partialorder %v159, 8.507059e+37
  %v161 = vand.u32 %v146, 2147483648
  %v162 = vor.u32 1.1754944e-38, %v161
  %v163 = vsel %vm160, %v162, %v158
  %v164 = vmul.f32 %v141, %v163
  %v165 = vrcp.pop %v149
  %v166 = vmul.f32 %v149, %v165
  %v167 = vsub.f32 1.0, %v166
  %v168 = vmul.f32 %v165, %v167
  %v169 = vadd.f32 %v165, %v168
  %vm170 = vweird.f32 %v149
  %vm171 = vweird.f32 %v165
  %vm172 = vmor %vm170, %vm171
  %v173 = vsel %vm172, %v165, %v169
  %v174 = vand.u32 2147483647, %v149
  %vm175 = vcmp.eq.f32.partialorder %v174, 8.507059e+37
  %v176 = vand.u32 %v149, 2147483648
  %v177 = vor.u32 1.1754944e-38, %v176
  %v178 = vsel %vm175, %v177, %v173
  %v179 = vmul.f32 %v143, %v178
  %180 = vrot.lane.b32.xlu0 %v86, 120
  %v181 = vpop.permute.xlu0 %180
  %182 = vrot.lane.b32.xlu0 %v89, 120
  %v183 = vpop.permute.xlu0 %182
  %v186 = vsel %vm130, %v164, 0
  %v189 = vsel %vm130, %v179, 0
  %vm191 = vcmask 1042432
  %v192 = vsel %vm191, %v183, 0
  %194 = vmatpush.msra.mxu0 0.0
  %195 = vmatpush.msra.mxu0 0.0
  %196 = vmatpush.msra.mxu0 0.0
  %197 = vmatpush.msra.mxu0 0.0
  %198 = vmatpush.msra.mxu0 0.0
  %199 = vmatpush.msra.mxu0 0.0
  %200 = vmatpush.msra.mxu0 0.0
  %201 = vmatpush.msra.mxu0 0.0
  %202 = vmatpush.msra.mxu0 0.0
  %203 = vmatpush.msra.mxu0 0.0
  %204 = vmatpush.msra.mxu0 0.0
  %205 = vmatpush.msra.mxu0 0.0
  %206 = vmatpush.msra.mxu0 0.0
  %207 = vmatpush.msra.mxu0 0.0
  %208 = vmatpush.msra.mxu0 %v192
  %209 = vmatpush.msra.mxu0 %v181
  %210 = vmatmul.f32.gmra.mxu0 %v186
  %v211 = vpop.f32.mrf.mxu0
  %v212 = vadd.f32 0.0, %v211
  %213 = vmatmul.f32.gmra.mxu0 %v189
  %v214 = vpop.f32.mrf.mxu0
  %v215 = vadd.f32 0.0, %v214
  %216 = vdwg.mxu0
  %v217 = vld [vmem:[%s1] sm:$0xff]
  %v218 = vld [vmem:[%s1 + $0x8] sm:$0xff]
  %v219 = vld [vmem:[%s2] sm:$0xff]
  %v220 = vld [vmem:[%s2 + $0x8] sm:$0xff]
  %v221 = vld [vmem:[%s2 + $0x10] sm:$0xff]
  %v222 = vld [vmem:[%s2 + $0x18] sm:$0xf]
  %vm223 = vcmask 228352
  %v225 = vsel %vm223, %v47, 0
  %v228 = vsel %vm64, %v222, 0
  %230 = vmatpush.msra.mxu0 0.0
  %231 = vmatpush.msra.mxu0 0.0
  %232 = vmatpush.msra.mxu0 0.0
  %233 = vmatpush.msra.mxu0 0.0
  %234 = vmatpush.msra.mxu0 0.0
  %235 = vmatpush.msra.mxu0 0.0
  %236 = vmatpush.msra.mxu0 0.0
  %237 = vmatpush.msra.mxu0 0.0
  %238 = vmatpush.msra.mxu0 0.0
  %239 = vmatpush.msra.mxu0 0.0
  %240 = vmatpush.msra.mxu0 0.0
  %241 = vmatpush.msra.mxu0 0.0
  %242 = vmatpush.msra.mxu0 %v228
  %243 = vmatpush.msra.mxu0 %v221
  %244 = vmatpush.msra.mxu0 %v220
  %245 = vmatpush.msra.mxu0 %v219
  %246 = vmatmul.f32.gmra.mxu0 %v225
  %v247 = vpop.f32.mrf.mxu0
  %v248 = vadd.f32 0.0, %v247
  %249 = vdwg.mxu0
  %vm250 = vcmask 130048
  %v252 = vsel %vm250, %v46, 0
  %254 = vmatpush.msra.mxu0 0.0
  %255 = vmatpush.msra.mxu0 0.0
  %256 = vmatpush.msra.mxu0 0.0
  %257 = vmatpush.msra.mxu0 0.0
  %258 = vmatpush.msra.mxu0 0.0
  %259 = vmatpush.msra.mxu0 0.0
  %260 = vmatpush.msra.mxu0 0.0
  %261 = vmatpush.msra.mxu0 0.0
  %262 = vmatpush.msra.mxu0 0.0
  %263 = vmatpush.msra.mxu0 0.0
  %264 = vmatpush.msra.mxu0 0.0
  %265 = vmatpush.msra.mxu0 0.0
  %266 = vmatpush.msra.mxu0 0.0
  %267 = vmatpush.msra.mxu0 0.0
  %268 = vmatpush.msra.mxu0 %v218
  %269 = vmatpush.msra.mxu0 %v217
  %270 = vmatmul.f32.gmra.mxu0 %v252
  %v271 = vpop.f32.mrf.mxu0
  %v272 = vadd.f32 %v248, %v271
  %273 = vdwg.mxu0
  %v275 = vsel %vm130, %v48, 0
  %v278 = vsel %vm191, %v215, 0
  %280 = vmatpush.msra.mxu0 0.0
  %281 = vmatpush.msra.mxu0 0.0
  %282 = vmatpush.msra.mxu0 0.0
  %283 = vmatpush.msra.mxu0 0.0
  %284 = vmatpush.msra.mxu0 0.0
  %285 = vmatpush.msra.mxu0 0.0
  %286 = vmatpush.msra.mxu0 0.0
  %287 = vmatpush.msra.mxu0 0.0
  %288 = vmatpush.msra.mxu0 0.0
  %289 = vmatpush.msra.mxu0 0.0
  %290 = vmatpush.msra.mxu0 0.0
  %291 = vmatpush.msra.mxu0 0.0
  %292 = vmatpush.msra.mxu0 0.0
  %293 = vmatpush.msra.mxu0 0.0
  %294 = vmatpush.msra.mxu0 %v278
  %295 = vmatpush.msra.mxu0 %v212
  %296 = vmatmul.f32.gmra.mxu0 %v275
  %v297 = vpop.f32.mrf.mxu0
  %v298 = vadd.f32 0.0, %v297
  %299 = vdwg.mxu0
  %v300 = vadd.f32 %v272, %v298
  %302 = vset.pattern.permute.xlu0 0
  %303 = vperm.xlu0 %302, %v49
  %v304 = vpop.permute.xlu0 %303
  %v306 = vadd.f32 %v300, %v304
  %308 = vset.pattern.permute.xlu0 0
  %309 = vperm.xlu0 %308, %v51
  %v310 = vpop.permute.xlu0 %309
  %vm312 = vcmask 64512
  %v314 = vsel %vm312, %v50, 0
  %316 = vmatpush.msra.mxu0 0.0
  %317 = vmatpush.msra.mxu0 0.0
  %318 = vmatpush.msra.mxu0 0.0
  %319 = vmatpush.msra.mxu0 0.0
  %320 = vmatpush.msra.mxu0 0.0
  %321 = vmatpush.msra.mxu0 0.0
  %322 = vmatpush.msra.mxu0 0.0
  %323 = vmatpush.msra.mxu0 0.0
  %324 = vmatpush.msra.mxu0 0.0
  %325 = vmatpush.msra.mxu0 0.0
  %326 = vmatpush.msra.mxu0 0.0
  %327 = vmatpush.msra.mxu0 0.0
  %328 = vmatpush.msra.mxu0 0.0
  %329 = vmatpush.msra.mxu0 0.0
  %330 = vmatpush.msra.mxu0 0.0
  %331 = vmatpush.msra.mxu0 %v306
  %332 = vmatmul.f32.gmra.mxu0 %v314
  %v333 = vpop.f32.mrf.mxu0
  %v334 = vadd.f32 %v310, %v333
  %335 = vdwg.mxu0
  %v336 = vld [vmem:[%s4] sm:$0x1]
  %v338 = vperm.slane %v336, 0
  %v340 = vmul.f32 %v334, %v338
  %v341 = vld [vmem:[%s3] sm:$0x1]
  %v343 = vperm.slane %v341, 0
  %v345 = vadd.f32 %v340, %v343
  %346 = vst.msk [vmem:[%s13] sm:$0xff] %vm57, %v345
  %s347 = scalar_lea.vmem %s0, 16
  %v348 = vld [vmem:[%s347] sm:$0xff]
  %v349 = vld [vmem:[%s347 + $0x8] sm:$0x7]
  %v351 = vsel %vm57, %v348, 0
  %v354 = vsel %vm57, %v349, 0
  %356 = vmatpush.msra.mxu0 0.0
  %357 = vmatpush.msra.mxu0 0.0
  %358 = vmatpush.msra.mxu0 0.0
  %359 = vmatpush.msra.mxu0 0.0
  %360 = vmatpush.msra.mxu0 0.0
  %361 = vmatpush.msra.mxu0 0.0
  %362 = vmatpush.msra.mxu0 0.0
  %363 = vmatpush.msra.mxu0 0.0
  %364 = vmatpush.msra.mxu0 0.0
  %365 = vmatpush.msra.mxu0 0.0
  %366 = vmatpush.msra.mxu0 0.0
  %367 = vmatpush.msra.mxu0 0.0
  %368 = vmatpush.msra.mxu0 0.0
  %369 = vmatpush.msra.mxu0 0.0
  %370 = vmatpush.msra.mxu0 0.0
  %371 = vmatpush.msra.mxu0 %v66
  %372 = vmatmul.f32.gmra.mxu0 %v351
  %v373 = vpop.f32.mrf.mxu0
  %v374 = vadd.f32 %v55, %v373
  %375 = vmatmul.f32.gmra.mxu0 %v354
  %v376 = vpop.f32.mrf.mxu0
  %v377 = vadd.f32 %v55, %v376
  %378 = vdwg.mxu0
  %381 = vrot.lane.b32.xlu0 %v374, 124
  %v382 = vpop.permute.xlu0 %381
  %383 = vrot.lane.b32.xlu0 %v377, 124
  %v384 = vpop.permute.xlu0 %383
  %v385 = vsel %vm57, %v374, 0
  %v387 = vsel %vm57, %v377, 0
  %v389 = vsel %vm57, %v382, 0
  %v391 = vsel %vm57, %v384, 0
  %393 = vmatpush.xpose.msra.mxu0 0.0
  %394 = vmatpush.xpose.msra.mxu0 0.0
  %395 = vmatpush.xpose.msra.mxu0 0.0
  %396 = vmatpush.xpose.msra.mxu0 0.0
  %397 = vmatpush.xpose.msra.mxu0 0.0
  %398 = vmatpush.xpose.msra.mxu0 0.0
  %399 = vmatpush.xpose.msra.mxu0 0.0
  %400 = vmatpush.xpose.msra.mxu0 0.0
  %401 = vmatpush.xpose.msra.mxu0 0.0
  %402 = vmatpush.xpose.msra.mxu0 0.0
  %403 = vmatpush.xpose.msra.mxu0 0.0
  %404 = vmatpush.xpose.msra.mxu0 0.0
  %405 = vmatpush.xpose.msra.mxu0 0.0
  %406 = vmatpush.xpose.msra.mxu0 0.0
  %407 = vmatpush.xpose.msra.mxu0 %v391
  %408 = vmatpush.xpose.msra.mxu0 %v389
  %409 = vmatmul.f32.gmra.mxu0 %v385
  %v410 = vpop.f32.mrf.mxu0
  %v411 = vadd.f32 0.0, %v410
  %412 = vmatmul.f32.gmra.mxu0 %v387
  %v413 = vpop.f32.mrf.mxu0
  %v414 = vadd.f32 0.0, %v413
  %415 = vdwg.mxu0
  %v416 = vmul.f32 %v411, 0.5
  %v417 = vmul.f32 %v414, 0.5
  %v418 = vsel %vm130, %v416, -inf
  %419 = vmax.xlane.f32.xlu0 %v418
  %v420 = vpop.xlane.xlu0 %419
  %v421 = vsel %vm134, %v417, -inf
  %422 = vmax.xlane.f32.xlu0 %v421
  %v423 = vpop.xlane.xlu0 %422
  %v424 = vsub.f32 %v416, %v420
  %v425 = vsub.f32 %v417, %v423
  %v426 = vmul.f32 %v424, 1.442695
  %v427 = vpow.pop %v426
  %v428 = vmul.f32 %v425, 1.442695
  %v429 = vpow.pop %v428
  %v430 = vsel %vm130, %v427, 0.0
  %431 = vadd.xlane.f32.xlu0 %v430
  %v432 = vpop.xlane.xlu0 %431
  %v433 = vsel %vm134, %v429, 0.0
  %434 = vadd.xlane.f32.xlu0 %v433
  %v435 = vpop.xlane.xlu0 %434
  %v436 = vrcp.pop %v432
  %v437 = vmul.f32 %v432, %v436
  %v438 = vsub.f32 1.0, %v437
  %v439 = vmul.f32 %v436, %v438
  %v440 = vadd.f32 %v436, %v439
  %vm441 = vweird.f32 %v432
  %vm442 = vweird.f32 %v436
  %vm443 = vmor %vm441, %vm442
  %v444 = vsel %vm443, %v436, %v440
  %v445 = vand.u32 2147483647, %v432
  %vm446 = vcmp.eq.f32.partialorder %v445, 8.507059e+37
  %v447 = vand.u32 %v432, 2147483648
  %v448 = vor.u32 1.1754944e-38, %v447
  %v449 = vsel %vm446, %v448, %v444
  %v450 = vmul.f32 %v427, %v449
  %v451 = vrcp.pop %v435
  %v452 = vmul.f32 %v435, %v451
  %v453 = vsub.f32 1.0, %v452
  %v454 = vmul.f32 %v451, %v453
  %v455 = vadd.f32 %v451, %v454
  %vm456 = vweird.f32 %v435
  %vm457 = vweird.f32 %v451
  %vm458 = vmor %vm456, %vm457
  %v459 = vsel %vm458, %v451, %v455
  %v460 = vand.u32 2147483647, %v435
  %vm461 = vcmp.eq.f32.partialorder %v460, 8.507059e+37
  %v462 = vand.u32 %v435, 2147483648
  %v463 = vor.u32 1.1754944e-38, %v462
  %v464 = vsel %vm461, %v463, %v459
  %v465 = vmul.f32 %v429, %v464
  %466 = vrot.lane.b32.xlu0 %v374, 120
  %v467 = vpop.permute.xlu0 %466
  %468 = vrot.lane.b32.xlu0 %v377, 120
  %v469 = vpop.permute.xlu0 %468
  %v472 = vsel %vm130, %v450, 0
  %v475 = vsel %vm130, %v465, 0
  %v477 = vsel %vm191, %v469, 0
  %479 = vmatpush.msra.mxu0 0.0
  %480 = vmatpush.msra.mxu0 0.0
  %481 = vmatpush.msra.mxu0 0.0
  %482 = vmatpush.msra.mxu0 0.0
  %483 = vmatpush.msra.mxu0 0.0
  %484 = vmatpush.msra.mxu0 0.0
  %485 = vmatpush.msra.mxu0 0.0
  %486 = vmatpush.msra.mxu0 0.0
  %487 = vmatpush.msra.mxu0 0.0
  %488 = vmatpush.msra.mxu0 0.0
  %489 = vmatpush.msra.mxu0 0.0
  %490 = vmatpush.msra.mxu0 0.0
  %491 = vmatpush.msra.mxu0 0.0
  %492 = vmatpush.msra.mxu0 0.0
  %493 = vmatpush.msra.mxu0 %v477
  %494 = vmatpush.msra.mxu0 %v467
  %495 = vmatmul.f32.gmra.mxu0 %v472
  %v496 = vpop.f32.mrf.mxu0
  %v497 = vadd.f32 0.0, %v496
  %498 = vmatmul.f32.gmra.mxu0 %v475
  %v499 = vpop.f32.mrf.mxu0
  %v500 = vadd.f32 0.0, %v499
  %501 = vdwg.mxu0
  %s502 = scalar_lea.vmem %s1, 16
  %v503 = vld [vmem:[%s502] sm:$0xff]
  %v504 = vld [vmem:[%s502 + $0x8] sm:$0xff]
  %s505 = scalar_lea.vmem %s2, 32
  %v506 = vld [vmem:[%s505] sm:$0xff]
  %v507 = vld [vmem:[%s505 + $0x8] sm:$0xff]
  %v508 = vld [vmem:[%s505 + $0x10] sm:$0xff]
  %v509 = vld [vmem:[%s505 + $0x18] sm:$0xf]
  %v511 = vsel %vm64, %v509, 0
  %513 = vmatpush.msra.mxu0 0.0
  %514 = vmatpush.msra.mxu0 0.0
  %515 = vmatpush.msra.mxu0 0.0
  %516 = vmatpush.msra.mxu0 0.0
  %517 = vmatpush.msra.mxu0 0.0
  %518 = vmatpush.msra.mxu0 0.0
  %519 = vmatpush.msra.mxu0 0.0
  %520 = vmatpush.msra.mxu0 0.0
  %521 = vmatpush.msra.mxu0 0.0
  %522 = vmatpush.msra.mxu0 0.0
  %523 = vmatpush.msra.mxu0 0.0
  %524 = vmatpush.msra.mxu0 0.0
  %525 = vmatpush.msra.mxu0 %v511
  %526 = vmatpush.msra.mxu0 %v508
  %527 = vmatpush.msra.mxu0 %v507
  %528 = vmatpush.msra.mxu0 %v506
  %529 = vmatmul.f32.gmra.mxu0 %v225
  %v530 = vpop.f32.mrf.mxu0
  %v531 = vadd.f32 0.0, %v530
  %532 = vdwg.mxu0
  %533 = vmatpush.msra.mxu0 0.0
  %534 = vmatpush.msra.mxu0 0.0
  %535 = vmatpush.msra.mxu0 0.0
  %536 = vmatpush.msra.mxu0 0.0
  %537 = vmatpush.msra.mxu0 0.0
  %538 = vmatpush.msra.mxu0 0.0
  %539 = vmatpush.msra.mxu0 0.0
  %540 = vmatpush.msra.mxu0 0.0
  %541 = vmatpush.msra.mxu0 0.0
  %542 = vmatpush.msra.mxu0 0.0
  %543 = vmatpush.msra.mxu0 0.0
  %544 = vmatpush.msra.mxu0 0.0
  %545 = vmatpush.msra.mxu0 0.0
  %546 = vmatpush.msra.mxu0 0.0
  %547 = vmatpush.msra.mxu0 %v504
  %548 = vmatpush.msra.mxu0 %v503
  %549 = vmatmul.f32.gmra.mxu0 %v252
  %v550 = vpop.f32.mrf.mxu0
  %v551 = vadd.f32 %v531, %v550
  %552 = vdwg.mxu0
  %v554 = vsel %vm191, %v500, 0
  %556 = vmatpush.msra.mxu0 0.0
  %557 = vmatpush.msra.mxu0 0.0
  %558 = vmatpush.msra.mxu0 0.0
  %559 = vmatpush.msra.mxu0 0.0
  %560 = vmatpush.msra.mxu0 0.0
  %561 = vmatpush.msra.mxu0 0.0
  %562 = vmatpush.msra.mxu0 0.0
  %563 = vmatpush.msra.mxu0 0.0
  %564 = vmatpush.msra.mxu0 0.0
  %565 = vmatpush.msra.mxu0 0.0
  %566 = vmatpush.msra.mxu0 0.0
  %567 = vmatpush.msra.mxu0 0.0
  %568 = vmatpush.msra.mxu0 0.0
  %569 = vmatpush.msra.mxu0 0.0
  %570 = vmatpush.msra.mxu0 %v554
  %571 = vmatpush.msra.mxu0 %v497
  %572 = vmatmul.f32.gmra.mxu0 %v275
  %v573 = vpop.f32.mrf.mxu0
  %v574 = vadd.f32 0.0, %v573
  %575 = vdwg.mxu0
  %v576 = vadd.f32 %v551, %v574
  %v577 = vadd.f32 %v576, %v304
  %578 = vmatpush.msra.mxu0 0.0
  %579 = vmatpush.msra.mxu0 0.0
  %580 = vmatpush.msra.mxu0 0.0
  %581 = vmatpush.msra.mxu0 0.0
  %582 = vmatpush.msra.mxu0 0.0
  %583 = vmatpush.msra.mxu0 0.0
  %584 = vmatpush.msra.mxu0 0.0
  %585 = vmatpush.msra.mxu0 0.0
  %586 = vmatpush.msra.mxu0 0.0
  %587 = vmatpush.msra.mxu0 0.0
  %588 = vmatpush.msra.mxu0 0.0
  %589 = vmatpush.msra.mxu0 0.0
  %590 = vmatpush.msra.mxu0 0.0
  %591 = vmatpush.msra.mxu0 0.0
  %592 = vmatpush.msra.mxu0 0.0
  %593 = vmatpush.msra.mxu0 %v577
  %594 = vmatmul.f32.gmra.mxu0 %v314
  %v595 = vpop.f32.mrf.mxu0
  %v596 = vadd.f32 %v310, %v595
  %597 = vdwg.mxu0
  %s598 = scalar_lea.vmem %s4, 1
  %v599 = vld [vmem:[%s598] sm:$0x1]
  %v601 = vperm.slane %v599, 0
  %v603 = vmul.f32 %v596, %v601
  %s604 = scalar_lea.vmem %s3, 1
  %v605 = vld [vmem:[%s604] sm:$0x1]
  %v607 = vperm.slane %v605, 0
  %v609 = vadd.f32 %v603, %v607
  %s610 = scalar_lea.vmem %s13, 8
  %611 = vst.msk [vmem:[%s610] sm:$0xff] %vm57, %v609
  // Predicated region
  $region54: #{_lambda_.1} parent=0 // pred_check
    _
  $region55: #{_lambda_.1} parent=0 // pred_check_branch
    %613 = sbr.rel (0) target = $region57
  $region56: #{_lambda_.1} parent=0 // pred_region
    _
  $region57: #{_lambda_.1} parent=0 // pred_fallthru
    _
  // Predicated region
  $region58: #{_lambda_.1} parent=0 // pred_check
    _
  $region59: #{_lambda_.1} parent=0 // pred_check_branch
    %615 = sbr.rel (0) target = $region61
  $region60: #{_lambda_.1} parent=0 // pred_region
    _
  $region61: #{_lambda_.1} parent=0 // pred_fallthru
    _

</llo_original>
